<compile_context>
chip_gen: v5e
topology: v5e:2x2
jax: 0.10.0
libtpu: 0.0.40
codegen_flags: <defaults>
</compile_context>

<pallas_src>
import jax
import jax.numpy as jnp
from jax.experimental import pallas as pl
from jax.experimental.pallas import tpu as pltpu


# ----------------------------------------------------------------------------
# Pallas kernel: identity pass-through as one direct HBM->HBM DMA.
# ----------------------------------------------------------------------------
def _hbm_copy_kernel(x_hbm_ref, o_hbm_ref, sem):
    cp = pltpu.make_async_copy(x_hbm_ref, o_hbm_ref, sem)
    cp.start()
    cp.wait()


def pallas_identity(x: jax.Array, *, donated: bool = False) -> jax.Array:
    """Exact pass-through of `x`.

    donated=True: the caller guarantees it no longer needs its copy of `x`, so
    no data movement is required at all and `x` is returned unchanged.

    donated=False: a fresh buffer is produced via a single HBM->HBM DMA issued
    from a grid-less Pallas kernel (no VMEM staging, no vreg traffic).
    """
    if donated:
        return x

    return pl.pallas_call(
        _hbm_copy_kernel,
        out_shape=jax.ShapeDtypeStruct(x.shape, x.dtype),
        in_specs=[pl.BlockSpec(memory_space=pl.ANY)],
        out_specs=pl.BlockSpec(memory_space=pl.ANY),
        scratch_shapes=[pltpu.SemaphoreType.DMA(())],
    )(x)


# ----------------------------------------------------------------------------
# JAX mirror of BaseModel (dispatch semantics reproduced exactly).
# ----------------------------------------------------------------------------
class Opt:
    """Minimal stand-in for the argparse `opt` namespace."""

    def __init__(self, num_gpus=0, checkpoints_dir="/tmp/ckpts", name="base",
                 isTrain=True, pretrained_name=None, resume_iter="latest"):
        self.num_gpus = num_gpus
        self.checkpoints_dir = checkpoints_dir
        self.name = name
        self.isTrain = isTrain
        self.pretrained_name = pretrained_name
        self.resume_iter = resume_iter


class BaseModel:
    @staticmethod
    def modify_commandline_options(parser, is_train):
        return parser

    def __init__(self, opt):
        self.opt = opt
        # PyTorch picks cuda:0 vs cpu; here the analogue is the default JAX device.
        self.device = jax.devices()[0]

    def initialize(self):
        pass

    def per_gpu_initialize(self):
        pass

    def compute_generator_losses(self, data_i):
        return {}

    def compute_discriminator_losses(self, data_i):
        return {}

    def get_visuals_for_snapshot(self, data_i):
        return {}

    def get_parameters_for_mode(self, mode):
        return {}

    # The pass-through data path (the only tensor semantics reachable through
    # this module), dispatchable via forward(..., command="pass_through").
    def pass_through(self, x, donated=False):
        return pallas_identity(x, donated=donated)

    # TODO(synk): save()/load() are filesystem checkpoint plumbing; not reproduced.

    def forward(self, *args, command=None, **kwargs):
        """Wrapper for multigpu training: dispatch `command` to a method."""
        if command is not None:
            method = getattr(self, command)
            assert callable(method), "[%s] is not a method of %s" % (
                command, type(self).__name__)
            return method(*args, **kwargs)
        else:
            raise ValueError(command)


# ----------------------------------------------------------------------------
# Main
# ----------------------------------------------------------------------------
if __name__ == "__main__":
    key = jax.random.PRNGKey(0)
    k1, k2 = jax.random.split(key)

    # Small NCHW input consistent with an image-translation model's data_i.
    x = jax.random.normal(k1, (2, 4, 16, 16), dtype=jnp.float32)
    data_i = {"real_A": x}

    opt = Opt(num_gpus=0)
    model = BaseModel(opt)

    # Exercise the forward-dispatch semantics exactly as in PyTorch.
    g_losses = model.forward(data_i, command="compute_generator_losses")
    d_losses = model.forward(data_i, command="compute_discriminator_losses")
    visuals = model.forward(data_i, command="get_visuals_for_snapshot")
    params = model.forward("generator", command="get_parameters_for_mode")
    assert g_losses == {} and d_losses == {} and visuals == {} and params == {}

    # command=None must raise ValueError, as in the reference module.
    try:
        model.forward(data_i)
        raise AssertionError("forward(command=None) should raise ValueError")
    except ValueError:
        pass

    # Pass-through data path via the Pallas HBM->HBM DMA kernel
    # (dispatched through forward), non-donating path: fresh buffer.
    y = model.forward(x, command="pass_through")
    jax.block_until_ready(y)
    assert y.shape == x.shape and y.dtype == x.dtype
    assert bool(jnp.all(y == x))

    # Donating path: no kernel, no copy — returns the same array object.
    y_donated = model.forward(x, command="pass_through", donated=True)
    assert y_donated is x

    # Also exercise a bf16 shape and a non-128-divisible trailing dim; the
    # HBM->HBM DMA handles both without masked partial stores.
    xb = jax.random.normal(k2, (2, 8, 64, 128), dtype=jnp.bfloat16)
    yb = pallas_identity(xb)
    jax.block_until_ready(yb)
    assert yb.shape == xb.shape and yb.dtype == xb.dtype
    assert bool(jnp.all(yb == xb))

    xc = jax.random.normal(k2, (3, 5, 17), dtype=jnp.float32)
    yc = pallas_identity(xc)
    jax.block_until_ready(yc)
    assert yc.shape == xc.shape and yc.dtype == xc.dtype
    assert bool(jnp.all(yc == xc))

    print("KERNEL_OK")
</pallas_src>

<mosaic_0001>
module attributes {stable_mosaic.version = 11 : i64} {
  func.func @_hbm_copy_kernel(%arg0: memref<2x4x16x16xf32, #tpu.memory_space<any>>, %arg1: memref<2x4x16x16xf32, #tpu.memory_space<any>>, %arg2: memref<!tpu.dma_semaphore, #tpu.memory_space<semaphore_mem>>) attributes {dimension_semantics = [], scalar_prefetch = 0 : i64, scratch_operands = 1 : i64, tpu.core_type = #tpu.core_type<tc>} {
    tpu.enqueue_dma source(%arg0 : memref<2x4x16x16xf32, #tpu.memory_space<any>>) target(%arg1 : memref<2x4x16x16xf32, #tpu.memory_space<any>>) target_semaphore(%arg2 : memref<!tpu.dma_semaphore, #tpu.memory_space<semaphore_mem>>)
    tpu.wait_dma2 semaphore(%arg2 : memref<!tpu.dma_semaphore, #tpu.memory_space<semaphore_mem>>) src(%arg0 : memref<2x4x16x16xf32, #tpu.memory_space<any>>) dst(%arg1 : memref<2x4x16x16xf32, #tpu.memory_space<any>>)
    return
  }
}

</mosaic_0001>

<llo_original>
// kernel: tpu_custom_call.1
$region0: #{tpu_custom_call.1}
  #allocation0 [shape = 'u32[]', space=smem, size = 0x4, offset = 0x4, fixed_abs, tag = 'smem constant byte address 0x4 - core index']
  #allocation1 [shape = 'u32[72,128]{1,0:T(1,128)}', space=vmem, size = 0x9000, scoped, tag = 'internal scratch']
  #allocation2 [shape = 's32[1]{0}', space=sflag, size = 0x4, scoped, tag = 'scratch operand']
  #allocation3 [shape = 's32[]', space=sflag, size = 0x4, offset = 0, fixed_abs, tag = 'sflag constant byte address 0x0 - dummy sync flag']
  #allocation4 [shape = 'u32[0]{0}', space=smem, size = 0, offset = 0, fixed_abs, tag = 'smem constant byte address 0x0 - null']
  %s0 = inlined_call_operand.hbm [shape: f32[2,4,16,16], index: 0, kind: input, shape index: {}]
  %s1 = inlined_call_operand.hbm [shape: f32[2,4,16,16], index: 1, kind: output, shape index: {}]
  %s2 = sld [smem:[#allocation0]]
  $region2: #{tpu_custom_call.1} parent=0
    _
  %s4 = ssub.s32 1, %s2
  %s5 = scalar_select 0, %s4, %s2
  %s7 = sshll.u32 1, 14
  %s8 = sxor.u32 4294967295, %s7
  %s10 = sshll.u32 %s0, 4
  %s11 = int_to_ptr.hbm [resolvable:$true] %s10
  %s12 = sshll.u32 %s1, 4
  %s13 = int_to_ptr.hbm [resolvable:$true] %s12
  %16 = dma.general %s11, 2048, %s13, [#allocation2], [#allocation3], [#allocation4], 0, 0
  %s17 = smul.u32 2, 4
  %s18 = smul.u32 %s17, 16
  %s19 = smul.u32 %s18, 1
  %s20 = sshll.u32 %s19, 4
  %21 = dma.done [#allocation2], %s20
  %22 = vsyncmov [#allocation2]
  %s23 = vpop.sfrf %22
  %p24 = scmp.eq.s32.totalorder %s23, 0
  %p25 = pneg %p24
  %27 = shalt.err (%p25)

</llo_original>
